<compile_context>
chip_gen: v7x
topology: tpu7x:2x2x1
jax: 0.10.0
libtpu: 0.0.40
codegen_flags: <defaults>
</compile_context>

<pallas_src>
import math

import jax
import jax.numpy as jnp
from jax import lax
from jax.experimental import pallas as pl
from jax.experimental.pallas import tpu as pltpu


def _gelu_exact(x):
    # nn.GELU() default is the exact (erf) formulation; done in f32.
    # TODO(synk): on v5e a tanh-approx GELU would move work to the EUP slot,
    # but exact erf is kept to match nn.GELU() semantics.
    return 0.5 * x * (1.0 + lax.erf(x * (1.0 / math.sqrt(2.0))))


def _round_up(n, m):
    return ((n + m - 1) // m) * m


def _choose_divisor_tile(dim, target, align):
    """Largest multiple of `align` that divides `dim` and is <= target; `dim` if none."""
    if dim <= target:
        return dim
    t = (min(target, dim) // align) * align
    while t >= align:
        if dim % t == 0:
            return t
        t -= align
    return dim


def _physical_vmem_bytes():
    """Per-core VMEM capacity; conservative 64 MiB fallback (v7x size)."""
    try:
        info = pltpu.get_tpu_info()
        for attr in ("vmem_capacity_bytes", "vmem_bytes", "vmem_size_bytes"):
            v = getattr(info, attr, None)
            if v:
                return int(v)
    except Exception:
        pass
    return 64 * 1024 * 1024


def _pick_row_tile(rows, tile_rows):
    tr = min(tile_rows, _round_up(rows, 8))
    if tr >= 256:
        tr = (tr // 256) * 256          # full 256x256 MXU passes on v6e/v7x
    else:
        tr = max(8, _round_up(tr, 8))
    # Keep >=2 row tiles so the "parallel" axis can shard across v7x's 2 TCs.
    if rows > 512 and pl.cdiv(rows, tr) < 2:
        tr = max(256, _round_up(pl.cdiv(rows, 2), 256))
    return tr


def _vmem_estimate(tr, th, E, itemsize, n_h_tiles):
    wfc = 2 * E * th * itemsize          # double-buffered W_fc column tile
    wpr = 2 * th * E * itemsize          # double-buffered W_proj row tile
    xb = 2 * tr * E * itemsize           # x row tile (double-buffered)
    ob = 2 * tr * E * itemsize           # output tile
    acc = tr * E * 4 if n_h_tiles > 1 else 0
    inter = tr * th * (4 + itemsize)     # f32 GELU intermediate + native-dtype copy
    bias = 2 * (th + E) * itemsize
    return wfc + wpr + xb + ob + acc + inter + bias


def _fit_tiles(tr, th, H, E, itemsize, budget, h_align):
    """Shrink (tr, th) until the VMEM working set fits the budget."""
    while _vmem_estimate(tr, th, E, itemsize, H // th) > budget:
        if th > max(512, h_align):
            new_th = _choose_divisor_tile(H, th // 2, h_align)
            if new_th < th:
                th = new_th
                continue
        if tr > 256:
            tr = max(256, (tr // 2) // 256 * 256)
            continue
        if th > h_align:
            new_th = _choose_divisor_tile(H, th // 2, h_align)
            if new_th < th:
                th = new_th
                continue
        break  # as small as we can go; let the compiler have the final say
    return tr, th


# ----------------------------------------------------------------------------
# Kernels
# ----------------------------------------------------------------------------

def mlp_kernel_acc(x_ref, wfc_ref, bfc_ref, wproj_ref, bproj_ref, out_ref, acc_ref):
    """Multi-hidden-tile path: f32 accumulator resident across the h axis."""
    h_idx = pl.program_id(1)

    @pl.when(h_idx == 0)
    def _init():
        acc_ref[...] = jnp.zeros_like(acc_ref)

    x = x_ref[...]
    # First matmul: native-dtype operands on the MXU, f32 accumulation.
    h = jnp.dot(x, wfc_ref[...], preferred_element_type=jnp.float32)
    h = h + bfc_ref[...].astype(jnp.float32)
    h = _gelu_exact(h)                      # f32 elementwise math
    h = h.astype(x_ref.dtype)               # back to native dtype for second MXU pass

    acc_ref[...] += jnp.dot(h, wproj_ref[...], preferred_element_type=jnp.float32)

    @pl.when(h_idx == pl.num_programs(1) - 1)
    def _finalize():
        y = acc_ref[...] + bproj_ref[...].astype(jnp.float32)
        # TODO(synk): dropout is identity here (eval mode / p=0); training-mode
        # dropout would need a pltpu.prng_seed / prng_random_bits mask path.
        out_ref[...] = y.astype(out_ref.dtype)


def mlp_kernel_single(x_ref, wfc_ref, bfc_ref, wproj_ref, bproj_ref, out_ref):
    """Fast path when H fits in a single hidden tile: no scratch accumulator."""
    x = x_ref[...]
    h = jnp.dot(x, wfc_ref[...], preferred_element_type=jnp.float32)
    h = h + bfc_ref[...].astype(jnp.float32)
    h = _gelu_exact(h)
    h = h.astype(x_ref.dtype)
    y = jnp.dot(h, wproj_ref[...], preferred_element_type=jnp.float32)
    y = y + bproj_ref[...].astype(jnp.float32)
    out_ref[...] = y.astype(out_ref.dtype)


# ----------------------------------------------------------------------------
# Wrapper
# ----------------------------------------------------------------------------

def mlp_pallas(x, w_fc, b_fc, w_proj, b_proj, *,
               tile_rows=1024, tile_h=512,
               compute_dtype=None, vmem_limit_bytes=None):
    """x: [B, T, E]; w_fc: [E, 4E]; b_fc: [4E]; w_proj: [4E, E]; b_proj: [E].

    compute_dtype: optional dtype (e.g. jnp.bfloat16) for the matmul operands.
      f32 inputs without it run the MXU in its slow multi-pass f32 mode and
      read 2x the weight bytes; accumulation is f32 either way.
    """
    B, T, E = x.shape
    E_in, H = w_fc.shape
    assert E_in == E and w_proj.shape == (H, E)
    rows = B * T
    out_dtype = x.dtype

    x2 = x.reshape(rows, E)
    b_fc2 = b_fc.reshape(1, H)
    b_proj2 = b_proj.reshape(1, E)

    if compute_dtype is not None and compute_dtype != x.dtype:
        x2 = x2.astype(compute_dtype)
        w_fc = w_fc.astype(compute_dtype)
        w_proj = w_proj.astype(compute_dtype)

    itemsize = jnp.dtype(x2.dtype).itemsize

    # Per-generation VMEM budget: leave headroom for Mosaic internal scratch
    # (GELU intermediate, cast copies, DMA descriptors).  v7x only has 64 MiB
    # per TC; v5e/v6e have 128 MiB but default scoped limits of 16/32 MiB.
    if vmem_limit_bytes is None:
        phys = _physical_vmem_bytes()
        vmem_limit_bytes = min(phys - 12 * 1024 * 1024, 112 * 1024 * 1024)
        vmem_limit_bytes = max(vmem_limit_bytes, 32 * 1024 * 1024)

    # Hidden tile: multiple of 256 (full MXU passes on v6e/v7x) that divides H.
    if H % 256 == 0:
        h_align = 256
    elif H % 128 == 0:
        h_align = 128
    else:
        h_align = 8
    th = _choose_divisor_tile(H, tile_h, h_align)

    # Row tile: large (amortizes streamed weights), 256-aligned when big.
    tr = _pick_row_tile(rows, tile_rows)

    # Shrink to fit ~75% of the VMEM limit (rest for compiler scratch).
    tr, th = _fit_tiles(tr, th, H, E, itemsize, int(vmem_limit_bytes * 0.75), h_align)

    n_row_tiles = pl.cdiv(rows, tr)      # last block may be partial: Pallas pads
    n_h_tiles = H // th
    grid = (n_row_tiles, n_h_tiles)

    # Weights are re-read once per row tile; that is the dominant DMA term.
    cost = pl.CostEstimate(
        flops=4 * rows * E * H,                                  # two matmuls
        transcendentals=rows * H,                                # erf per hidden act
        bytes_accessed=(n_row_tiles * 2 * E * H + 2 * rows * E + H + E) * itemsize,
    )

    in_specs = [
        pl.BlockSpec((tr, E), lambda i, h: (i, 0)),    # x row tile
        pl.BlockSpec((E, th), lambda i, h: (0, h)),    # W_fc column tile
        pl.BlockSpec((1, th), lambda i, h: (0, h)),    # b_fc tile
        pl.BlockSpec((th, E), lambda i, h: (h, 0)),    # W_proj row tile
        pl.BlockSpec((1, E), lambda i, h: (0, 0)),     # b_proj
    ]
    out_spec = pl.BlockSpec((tr, E), lambda i, h: (i, 0))

    if n_h_tiles == 1:
        kernel = mlp_kernel_single
        scratch_shapes = []
    else:
        kernel = mlp_kernel_acc
        scratch_shapes = [pltpu.VMEM((tr, E), jnp.float32)]

    # NOTE: for a partial last row block, Pallas-padded input rows hold
    # unspecified data; rows are independent (the reduction is over E/H, never
    # rows), so valid output rows are unaffected and padded output rows are
    # masked on store.
    out2 = pl.pallas_call(
        kernel,
        out_shape=jax.ShapeDtypeStruct((rows, E), out_dtype),
        grid_spec=pltpu.PrefetchScalarGridSpec(
            num_scalar_prefetch=0,
            grid=grid,
            in_specs=in_specs,
            out_specs=out_spec,
            scratch_shapes=scratch_shapes,
        ),
        compiler_params=pltpu.CompilerParams(
            dimension_semantics=("parallel", "arbitrary"),
            vmem_limit_bytes=int(vmem_limit_bytes),
        ),
        cost_estimate=cost,
    )(x2, w_fc, b_fc2, w_proj, b_proj2)

    return out2.reshape(B, T, E)


# ----------------------------------------------------------------------------
# References & self-test
# ----------------------------------------------------------------------------

def mlp_reference(x, w_fc, b_fc, w_proj, b_proj):
    h = jnp.dot(x, w_fc) + b_fc
    h = _gelu_exact(h)
    return jnp.dot(h, w_proj) + b_proj


def mlp_reference_bf16(x, w_fc, b_fc, w_proj, b_proj):
    """Mimics the kernel's compute_dtype=bf16 path (bf16 operands, f32 accum)."""
    xb = x.astype(jnp.bfloat16)
    h = jnp.dot(xb, w_fc.astype(jnp.bfloat16), preferred_element_type=jnp.float32)
    h = _gelu_exact(h + b_fc)
    h = h.astype(jnp.bfloat16)
    y = jnp.dot(h, w_proj.astype(jnp.bfloat16), preferred_element_type=jnp.float32)
    return y + b_proj


def _make_params(B, T, E, seed=0, dtype=jnp.float32):
    H = 4 * E
    key = jax.random.PRNGKey(seed)
    kx, k1, k2, k3, k4 = jax.random.split(key, 5)
    x = jax.random.normal(kx, (B, T, E), dtype=jnp.float32).astype(dtype)
    bound_fc = 1.0 / math.sqrt(E)
    w_fc = jax.random.uniform(k1, (E, H), jnp.float32, -bound_fc, bound_fc).astype(dtype)
    b_fc = jax.random.uniform(k2, (H,), jnp.float32, -bound_fc, bound_fc).astype(dtype)
    bound_pr = 1.0 / math.sqrt(H)
    w_proj = jax.random.uniform(k3, (H, E), jnp.float32, -bound_pr, bound_pr).astype(dtype)
    b_proj = jax.random.uniform(k4, (E,), jnp.float32, -bound_pr, bound_pr).astype(dtype)
    return x, w_fc, b_fc, w_proj, b_proj


if __name__ == "__main__":
    # Case 1: toy GPT-style config (B=2, T=8, n_embd=32, H=128), f32, defaults.
    # Exercises the single-hidden-tile fast path (no accumulator scratch).
    x, w_fc, b_fc, w_proj, b_proj = _make_params(2, 8, 32)
    out = mlp_pallas(x, w_fc, b_fc, w_proj, b_proj)
    out = jax.block_until_ready(out)
    ref = mlp_reference(x, w_fc, b_fc, w_proj, b_proj)
    assert out.shape == x.shape
    assert jnp.allclose(out, ref, atol=1e-4, rtol=1e-4), "case 1 mismatch vs reference"

    # Case 2: exercises the H-tiling accumulator path (H=512 split into 2 tiles)
    # and a partial last row block (rows=48, tr=32 -> 2 tiles, second padded).
    x, w_fc, b_fc, w_proj, b_proj = _make_params(3, 16, 128)
    out = mlp_pallas(x, w_fc, b_fc, w_proj, b_proj, tile_rows=32, tile_h=256)
    out = jax.block_until_ready(out)
    ref = mlp_reference(x, w_fc, b_fc, w_proj, b_proj)
    assert out.shape == x.shape
    assert jnp.allclose(out, ref, atol=1e-4, rtol=1e-4), "case 2 mismatch vs reference"

    # Case 3: f32 inputs with compute_dtype=bf16 (fast MXU mode, half weight DMA).
    x, w_fc, b_fc, w_proj, b_proj = _make_params(2, 8, 64, seed=1)
    out = mlp_pallas(x, w_fc, b_fc, w_proj, b_proj, compute_dtype=jnp.bfloat16)
    out = jax.block_until_ready(out)
    ref = mlp_reference_bf16(x, w_fc, b_fc, w_proj, b_proj)
    assert out.shape == x.shape
    assert jnp.allclose(out, ref, atol=2e-2, rtol=2e-2), "case 3 mismatch vs bf16 reference"

    print("KERNEL_OK")
</pallas_src>

<mosaic_0001>
module attributes {stable_mosaic.version = 11 : i64} {
  func.func @mlp_kernel_single(%arg0: i32, %arg1: i32, %arg2: memref<16x32xf32, #tpu.memory_space<vmem>>, %arg3: memref<32x128xf32, #tpu.memory_space<vmem>>, %arg4: memref<1x128xf32, #tpu.memory_space<vmem>>, %arg5: memref<128x32xf32, #tpu.memory_space<vmem>>, %arg6: memref<1x32xf32, #tpu.memory_space<vmem>>, %arg7: memref<16x32xf32, #tpu.memory_space<vmem>>) attributes {dimension_semantics = [#tpu.dimension_semantics<parallel>, #tpu.dimension_semantics<arbitrary>], iteration_bounds = array<i64: 1, 1>, scalar_prefetch = 0 : i64, scratch_operands = 0 : i64, tpu.core_type = #tpu.core_type<tc>, window_params = [{transform_indices = @transform_0, window_bounds = array<i64: 16, 32>}, {transform_indices = @transform_1, window_bounds = array<i64: 32, 128>}, {transform_indices = @transform_2, window_bounds = array<i64: 1, 128>}, {transform_indices = @transform_3, window_bounds = array<i64: 128, 32>}, {pipeline_mode = #tpu.pipeline_mode<synchronous>, transform_indices = @transform_4, window_bounds = array<i64: 1, 32>}, {transform_indices = @transform_5, window_bounds = array<i64: 16, 32>}]} {
    %c0 = arith.constant 0 : index
    %c0_0 = arith.constant 0 : index
    %0 = vector.load %arg2[%c0, %c0_0] : memref<16x32xf32, #tpu.memory_space<vmem>>, vector<16x32xf32>
    %c0_1 = arith.constant 0 : index
    %c0_2 = arith.constant 0 : index
    %1 = vector.load %arg3[%c0_1, %c0_2] : memref<32x128xf32, #tpu.memory_space<vmem>>, vector<32x128xf32>
    %cst = arith.constant dense<0.000000e+00> : vector<16x128xf32>
    %2 = tpu.matmul %0, %1, %cst {dimension_numbers = #tpu.dot_dimension_numbers<[1], [0], [0], [1], [0, 0, 1, 1], [], []>} : vector<16x32xf32>, vector<32x128xf32>, vector<16x128xf32> -> vector<16x128xf32>
    %c0_3 = arith.constant 0 : index
    %c0_4 = arith.constant 0 : index
    %3 = vector.load %arg4[%c0_3, %c0_4] : memref<1x128xf32, #tpu.memory_space<vmem>>, vector<1x128xf32>
    %4 = vector.broadcast %3 : vector<1x128xf32> to vector<16x128xf32>
    %5 = arith.addf %2, %4 : vector<16x128xf32>
    %cst_5 = arith.constant 5.000000e-01 : f32
    %6 = vector.broadcast %cst_5 : f32 to vector<16x128xf32>
    %7 = arith.mulf %6, %5 : vector<16x128xf32>
    %cst_6 = arith.constant 0.707106769 : f32
    %8 = vector.broadcast %cst_6 : f32 to vector<16x128xf32>
    %9 = arith.mulf %5, %8 : vector<16x128xf32>
    %10 = math.erf %9 : vector<16x128xf32>
    %cst_7 = arith.constant 1.000000e+00 : f32
    %11 = vector.broadcast %cst_7 : f32 to vector<16x128xf32>
    %12 = arith.addf %11, %10 : vector<16x128xf32>
    %13 = arith.mulf %7, %12 : vector<16x128xf32>
    %c0_8 = arith.constant 0 : index
    %c0_9 = arith.constant 0 : index
    %14 = vector.load %arg5[%c0_8, %c0_9] : memref<128x32xf32, #tpu.memory_space<vmem>>, vector<128x32xf32>
    %cst_10 = arith.constant dense<0.000000e+00> : vector<16x32xf32>
    %15 = tpu.matmul %13, %14, %cst_10 {dimension_numbers = #tpu.dot_dimension_numbers<[1], [0], [0], [1], [0, 0, 1, 1], [], []>} : vector<16x128xf32>, vector<128x32xf32>, vector<16x32xf32> -> vector<16x32xf32>
    %c0_11 = arith.constant 0 : index
    %c0_12 = arith.constant 0 : index
    %16 = vector.load %arg6[%c0_11, %c0_12] : memref<1x32xf32, #tpu.memory_space<vmem>>, vector<1x32xf32>
    %17 = vector.broadcast %16 : vector<1x32xf32> to vector<16x32xf32>
    %18 = arith.addf %15, %17 : vector<16x32xf32>
    %c0_13 = arith.constant 0 : index
    %c0_14 = arith.constant 0 : index
    %19 = vector.load %arg7[%c0_13, %c0_14] : memref<16x32xf32, #tpu.memory_space<vmem>>, vector<16x32xf32>
    tpu.vector_store %arg7[%c0_13, %c0_14], %18 {strides = array<i32>} : memref<16x32xf32, #tpu.memory_space<vmem>>, vector<16x32xf32>,
    return
  }
  func.func @transform_0(%arg0: i32, %arg1: i32) -> (i32, i32) {
    %c0_i32 = arith.constant 0 : i32
    %c0_i32_0 = arith.constant 0 : i32
    return %arg0, %c0_i32 : i32, i32
  }
  func.func @transform_1(%arg0: i32, %arg1: i32) -> (i32, i32) {
    %c0_i32 = arith.constant 0 : i32
    %c0_i32_0 = arith.constant 0 : i32
    return %c0_i32, %arg1 : i32, i32
  }
  func.func @transform_2(%arg0: i32, %arg1: i32) -> (i32, i32) {
    %c0_i32 = arith.constant 0 : i32
    %c0_i32_0 = arith.constant 0 : i32
    return %c0_i32, %arg1 : i32, i32
  }
  func.func @transform_3(%arg0: i32, %arg1: i32) -> (i32, i32) {
    %c0_i32 = arith.constant 0 : i32
    %c0_i32_0 = arith.constant 0 : i32
    return %arg1, %c0_i32 : i32, i32
  }
  func.func @transform_4(%arg0: i32, %arg1: i32) -> (i32, i32) {
    %c0_i32 = arith.constant 0 : i32
    %c0_i32_0 = arith.constant 0 : i32
    %c0_i32_1 = arith.constant 0 : i32
    return %c0_i32, %c0_i32_0 : i32, i32
  }
  func.func @transform_5(%arg0: i32, %arg1: i32) -> (i32, i32) {
    %c0_i32 = arith.constant 0 : i32
    %c0_i32_0 = arith.constant 0 : i32
    return %arg0, %c0_i32 : i32, i32
  }
}

</mosaic_0001>

<llo_original>
// kernel: tpu_custom_call.1
$region0: #{tpu_custom_call.1}
  #allocation0 [shape = 'u32[]', space=smem, size = 0x4, offset = 0x4, fixed_abs, tag = 'smem constant byte address 0x4 - core index']
  #allocation1 [shape = 'u32[144,128]{1,0:T(1,128)}', space=vmem, size = 0x12000, scoped, tag = 'internal scratch']
  %s0 = inlined_call_operand.vmem [shape: f32[16,32], index: 0, kind: input, shape index: {}]
  %s1 = inlined_call_operand.vmem [shape: f32[32,128], index: 1, kind: input, shape index: {}]
  %s2 = inlined_call_operand.vmem [shape: f32[1,128], index: 2, kind: input, shape index: {}]
  %s3 = inlined_call_operand.vmem [shape: f32[128,32], index: 3, kind: input, shape index: {}]
  %s4 = inlined_call_operand.vmem [shape: f32[1,32], index: 4, kind: input, shape index: {}]
  %s5 = inlined_call_operand.hbm [shape: f32[16,32], index: 5, kind: output, shape index: {}]
  %s6 = sld [smem:[#allocation0]]
  $region30: #{tpu_custom_call.1} parent=0
    _
  %s8 = ssub.s32 1, %s6
  %s9 = scalar_select 0, %s8, %s6
  $region1: #{tpu_custom_call.1} parent=0
    #allocation2 [shape = 'u8[8192]{0}', space=vmem, size = 0x2000, scoped, tag = 'output window, operand 0, single buffered']
    #allocation3 [shape = 's32[1]{0}', space=sflag, size = 0x4, scoped, tag = 'scoped memory for tpu_custom_call.1']
    %10 = vsyncpa [#allocation3], 0
    // Predicated region
    $region2: #{tpu_custom_call.1} parent=1 // pred_check
      _
    $region3: #{tpu_custom_call.1} parent=1 // pred_check_branch
      %12 = sbr.rel (0) target = $region5
    $region4: #{tpu_custom_call.1} parent=1 // pred_region
      _
    $region5: #{tpu_custom_call.1} parent=1 // pred_fallthru
      _
    // Predicated region
    $region6: #{tpu_custom_call.1} parent=1 // pred_check
      _
    $region7: #{tpu_custom_call.1} parent=1 // pred_check_branch
      %14 = sbr.rel (0) target = $region9
    $region8: #{tpu_custom_call.1} parent=1 // pred_region
      _
    $region9: #{tpu_custom_call.1} parent=1 // pred_fallthru
      _
    // Predicated region
    $region10: #{tpu_custom_call.1} parent=1 // pred_check
      _
    $region11: #{tpu_custom_call.1} parent=1 // pred_check_branch
      %16 = sbr.rel (0) target = $region13
    $region12: #{tpu_custom_call.1} parent=1 // pred_region
      _
    $region13: #{tpu_custom_call.1} parent=1 // pred_fallthru
      _
    // Predicated region
    $region14: #{tpu_custom_call.1} parent=1 // pred_check
      _
    $region15: #{tpu_custom_call.1} parent=1 // pred_check_branch
      %18 = sbr.rel (0) target = $region17
    $region16: #{tpu_custom_call.1} parent=1 // pred_region
      _
    $region17: #{tpu_custom_call.1} parent=1 // pred_fallthru
      _
    // Predicated region
    $region18: #{tpu_custom_call.1} parent=1 // pred_check
      _
    $region19: #{tpu_custom_call.1} parent=1 // pred_check_branch
      %20 = sbr.rel (0) target = $region21
    $region20: #{tpu_custom_call.1} parent=1 // pred_region
      _
    $region21: #{tpu_custom_call.1} parent=1 // pred_fallthru
      _
    %v21 = vld [vmem:[%s0] sm:$0xff]
    %v22 = vld [vmem:[%s0 + $0x8] sm:$0xff]
    %v23 = vld [vmem:[%s1] sm:$0xff]
    %v24 = vld [vmem:[%s1 + $0x8] sm:$0xff]
    %v25 = vld [vmem:[%s1 + $0x10] sm:$0xff]
    %v26 = vld [vmem:[%s1 + $0x18] sm:$0xff]
    %v27 = vld [vmem:[%s2] sm:$0x1]
    %v29 = vlaneseq
    %v30 = vshrl.u32 %v29, 7
    %v31 = vsub.s32 0, %v30
    %v32 = vrot.slane %v27, %v31
    %vm34 = vcmask 261120
    %v36 = vsel %vm34, %v21, 0
    %v39 = vsel %vm34, %v22, 0
    %41 = vmatprep.subr.mxu0 0.0
    %42 = vmatpush1.msra.mxu0 %v23
    %43 = vmatprep.subr.mxu0 0.0
    %44 = vmatpush1.msra.mxu0 %v24
    %45 = vmatprep.subr.mxu0 0.0
    %46 = vmatpush1.msra.mxu0 %v25
    %47 = vmatprep.subr.mxu0 0.0
    %48 = vmatpush1.msra.mxu0 %v26
    %49 = vmatprep.subr.mxu0 0.0
    %50 = vmatpush1.msra.mxu0 0.0
    %51 = vmatprep.subr.mxu0 0.0
    %52 = vmatpush1.msra.mxu0 0.0
    %53 = vmatprep.subr.mxu0 0.0
    %54 = vmatpush1.msra.mxu0 0.0
    %55 = vmatprep.subr.mxu0 0.0
    %56 = vmatpush1.msra.mxu0 0.0
    %57 = vmatprep.subr.mxu0 0.0
    %58 = vmatpush1.msra.mxu0 0.0
    %59 = vmatprep.subr.mxu0 0.0
    %60 = vmatpush1.msra.mxu0 0.0
    %61 = vmatprep.subr.mxu0 0.0
    %62 = vmatpush1.msra.mxu0 0.0
    %63 = vmatprep.subr.mxu0 0.0
    %64 = vmatpush1.msra.mxu0 0.0
    %65 = vmatprep.subr.mxu0 0.0
    %66 = vmatpush1.msra.mxu0 0.0
    %67 = vmatprep.subr.mxu0 0.0
    %68 = vmatpush1.msra.mxu0 0.0
    %69 = vmatprep.subr.mxu0 0.0
    %70 = vmatpush1.msra.mxu0 0.0
    %71 = vmatprep.subr.mxu0 0.0
    %72 = vmatpush1.msra.mxu0 0.0
    %73 = vmatprep.subr.mxu0 0.0
    %74 = vmatpush1.msra.mxu0 0.0
    %75 = vmatprep.subr.mxu0 0.0
    %76 = vmatpush1.msra.mxu0 0.0
    %77 = vmatprep.subr.mxu0 0.0
    %78 = vmatpush1.msra.mxu0 0.0
    %79 = vmatprep.subr.mxu0 0.0
    %80 = vmatpush1.msra.mxu0 0.0
    %81 = vmatprep.subr.mxu0 0.0
    %82 = vmatpush1.msra.mxu0 0.0
    %83 = vmatprep.subr.mxu0 0.0
    %84 = vmatpush1.msra.mxu0 0.0
    %85 = vmatprep.subr.mxu0 0.0
    %86 = vmatpush1.msra.mxu0 0.0
    %87 = vmatprep.subr.mxu0 0.0
    %88 = vmatpush1.msra.mxu0 0.0
    %89 = vmatprep.subr.mxu0 0.0
    %90 = vmatpush1.msra.mxu0 0.0
    %91 = vmatprep.subr.mxu0 0.0
    %92 = vmatpush1.msra.mxu0 0.0
    %93 = vmatprep.subr.mxu0 0.0
    %94 = vmatpush1.msra.mxu0 0.0
    %95 = vmatprep.subr.mxu0 0.0
    %96 = vmatpush1.msra.mxu0 0.0
    %97 = vmatprep.subr.mxu0 0.0
    %98 = vmatpush1.msra.mxu0 0.0
    %99 = vmatprep.subr.mxu0 0.0
    %100 = vmatpush1.msra.mxu0 0.0
    %101 = vmatprep.subr.mxu0 0.0
    %102 = vmatpush1.msra.mxu0 0.0
    %103 = vmatprep.subr.mxu0 0.0
    %104 = vmatpush1.msra.mxu0 0.0
    %105 = vmatprep.mubr.f32.mxu0 0.0
    %106 = vmatmul.mubr.f32.gmra.mrb[0].mxu0 %v36
    %v107 = vpop.f32.mrb[0].mxu0
    %v108 = vadd.f32 %v32, %v107
    %v109 = vpop.f32.mrb[0].mxu0
    %110 = vmatprep.mubr.f32.mxu0 0.0
    %111 = vmatmul.mubr.f32.gmra.mrb[0].mxu0 %v39
    %v112 = vpop.f32.mrb[0].mxu0
    %v113 = vadd.f32 %v32, %v112
    %v114 = vpop.f32.mrb[0].mxu0
    %115 = vdwg.mxu0
    %v116 = vmul.f32 %v108, 0.5
    %v117 = vmul.f32 %v113, 0.5
    %v118 = vmul.f32 %v108, 0.70710677
    %v119 = vmul.f32 %v113, 0.70710677
    %v120 = verf.f32.pop %v118
    %v121 = verf.f32.pop %v119
    %v122 = vadd.f32 %v120, 1.0
    %v123 = vadd.f32 %v121, 1.0
    %v124 = vmul.f32 %v116, %v122
    %v125 = vmul.f32 %v117, %v123
    %v126 = vld [vmem:[%s3] sm:$0xff]
    %v127 = vld [vmem:[%s3 + $0x8] sm:$0xff]
    %v128 = vld [vmem:[%s3 + $0x10] sm:$0xff]
    %v129 = vld [vmem:[%s3 + $0x18] sm:$0xff]
    %v130 = vld [vmem:[%s3 + $0x20] sm:$0xff]
    %v131 = vld [vmem:[%s3 + $0x28] sm:$0xff]
    %v132 = vld [vmem:[%s3 + $0x30] sm:$0xff]
    %v133 = vld [vmem:[%s3 + $0x38] sm:$0xff]
    %v134 = vld [vmem:[%s3 + $0x40] sm:$0xff]
    %v135 = vld [vmem:[%s3 + $0x48] sm:$0xff]
    %v136 = vld [vmem:[%s3 + $0x50] sm:$0xff]
    %v137 = vld [vmem:[%s3 + $0x58] sm:$0xff]
    %v138 = vld [vmem:[%s3 + $0x60] sm:$0xff]
    %v139 = vld [vmem:[%s3 + $0x68] sm:$0xff]
    %v140 = vld [vmem:[%s3 + $0x70] sm:$0xff]
    %v141 = vld [vmem:[%s3 + $0x78] sm:$0xff]
    %v142 = vld [vmem:[%s4] sm:$0x1]
    %v144 = vlaneseq
    %v145 = vshrl.u32 %v144, 7
    %v146 = vsub.s32 0, %v145
    %v147 = vrot.slane %v142, %v146
    %149 = vmatprep.subr.mxu0 0.0
    %150 = vmatpush1.msra.mxu0 %v126
    %151 = vmatprep.subr.mxu0 0.0
    %152 = vmatpush1.msra.mxu0 %v127
    %153 = vmatprep.subr.mxu0 0.0
    %154 = vmatpush1.msra.mxu0 %v128
    %155 = vmatprep.subr.mxu0 0.0
    %156 = vmatpush1.msra.mxu0 %v129
    %157 = vmatprep.subr.mxu0 0.0
    %158 = vmatpush1.msra.mxu0 %v130
    %159 = vmatprep.subr.mxu0 0.0
    %160 = vmatpush1.msra.mxu0 %v131
    %161 = vmatprep.subr.mxu0 0.0
    %162 = vmatpush1.msra.mxu0 %v132
    %163 = vmatprep.subr.mxu0 0.0
    %164 = vmatpush1.msra.mxu0 %v133
    %165 = vmatprep.subr.mxu0 0.0
    %166 = vmatpush1.msra.mxu0 %v134
    %167 = vmatprep.subr.mxu0 0.0
    %168 = vmatpush1.msra.mxu0 %v135
    %169 = vmatprep.subr.mxu0 0.0
    %170 = vmatpush1.msra.mxu0 %v136
    %171 = vmatprep.subr.mxu0 0.0
    %172 = vmatpush1.msra.mxu0 %v137
    %173 = vmatprep.subr.mxu0 0.0
    %174 = vmatpush1.msra.mxu0 %v138
    %175 = vmatprep.subr.mxu0 0.0
    %176 = vmatpush1.msra.mxu0 %v139
    %177 = vmatprep.subr.mxu0 0.0
    %178 = vmatpush1.msra.mxu0 %v140
    %179 = vmatprep.subr.mxu0 0.0
    %180 = vmatpush1.msra.mxu0 %v141
    %181 = vmatprep.subr.mxu0 0.0
    %182 = vmatpush1.msra.mxu0 0.0
    %183 = vmatprep.subr.mxu0 0.0
    %184 = vmatpush1.msra.mxu0 0.0
    %185 = vmatprep.subr.mxu0 0.0
    %186 = vmatpush1.msra.mxu0 0.0
    %187 = vmatprep.subr.mxu0 0.0
    %188 = vmatpush1.msra.mxu0 0.0
    %189 = vmatprep.subr.mxu0 0.0
    %190 = vmatpush1.msra.mxu0 0.0
    %191 = vmatprep.subr.mxu0 0.0
    %192 = vmatpush1.msra.mxu0 0.0
    %193 = vmatprep.subr.mxu0 0.0
    %194 = vmatpush1.msra.mxu0 0.0
    %195 = vmatprep.subr.mxu0 0.0
    %196 = vmatpush1.msra.mxu0 0.0
    %197 = vmatprep.subr.mxu0 0.0
    %198 = vmatpush1.msra.mxu0 0.0
    %199 = vmatprep.subr.mxu0 0.0
    %200 = vmatpush1.msra.mxu0 0.0
    %201 = vmatprep.subr.mxu0 0.0
    %202 = vmatpush1.msra.mxu0 0.0
    %203 = vmatprep.subr.mxu0 0.0
    %204 = vmatpush1.msra.mxu0 0.0
    %205 = vmatprep.subr.mxu0 0.0
    %206 = vmatpush1.msra.mxu0 0.0
    %207 = vmatprep.subr.mxu0 0.0
    %208 = vmatpush1.msra.mxu0 0.0
    %209 = vmatprep.subr.mxu0 0.0
    %210 = vmatpush1.msra.mxu0 0.0
    %211 = vmatprep.subr.mxu0 0.0
    %212 = vmatpush1.msra.mxu0 0.0
    %213 = vmatprep.mubr.f32.mxu0 0.0
    %214 = vmatmul.mubr.f32.gmra.mrb[0].mxu0 %v124
    %v215 = vpop.f32.mrb[0].mxu0
    %v216 = vadd.f32 %v147, %v215
    %v217 = vpop.f32.mrb[0].mxu0
    %218 = vmatprep.mubr.f32.mxu0 0.0
    %219 = vmatmul.mubr.f32.gmra.mrb[0].mxu0 %v125
    %v220 = vpop.f32.mrb[0].mxu0
    %v221 = vadd.f32 %v147, %v220
    %v222 = vpop.f32.mrb[0].mxu0
    %223 = vdwg.mxu0
    %224 = vst.msk [vmem:[#allocation2] sm:$0xff] %vm34, %v216
    %225 = vst.msk [vmem:[#allocation2 + $0x8] sm:$0xff] %vm34, %v221
    // Predicated region
    $region22: #{tpu_custom_call.1} parent=1 // pred_check
      _
    $region23: #{tpu_custom_call.1} parent=1 // pred_check_branch
      %227 = sbr.rel (0) target = $region25
    $region24: #{tpu_custom_call.1} parent=1 // pred_region
      %s229 = ssub.s32 256, 256
      %230 = vsyncadd [#allocation3], %s229
      %s231 = sshll.u32 [#allocation2], 4
      %s232 = int_to_ptr.vmem [resolvable:$true] %s231
      %237 = dma.vmem_to_hbm [thread:$0]  %s232, 256, %s5, [#allocation3], 128, 128, 8
    $region25: #{tpu_custom_call.1} parent=1 // pred_fallthru
      _
    // Predicated region
    $region26: #{tpu_custom_call.1} parent=1 // pred_check
      _
    $region27: #{tpu_custom_call.1} parent=1 // pred_check_branch
      %239 = sbr.rel (0) target = $region29
    $region28: #{tpu_custom_call.1} parent=1 // pred_region
      %240 = dma.done [#allocation3], 256
    $region29: #{tpu_custom_call.1} parent=1 // pred_fallthru
      _
    %241 = vsyncpa [#allocation3], 1

</llo_original>
